<compile_context>
chip_gen: v7x
topology: tpu7x:2x2x1
jax: 0.10.0
libtpu: 0.0.40
codegen_flags: <defaults>
</compile_context>

<pallas_src>
import jax
import jax.numpy as jnp
from jax.experimental import pallas as pl
from jax.experimental.pallas import tpu as pltpu


_MAX_DMA_CHUNKS = 8          # enough descriptors to keep the DMA engines busy
_MIN_CHUNK_BYTES = 1 << 20   # don't split copies into chunks smaller than ~1 MiB


def _plan_chunks(shape, itemsize):
    """Static (start, size) chunks along axis 0, or None for a single full-ref DMA."""
    if len(shape) == 0:
        return None
    dim0 = shape[0]
    total_bytes = itemsize
    for d in shape:
        total_bytes *= d
    want = min(_MAX_DMA_CHUNKS, dim0, max(1, total_bytes // _MIN_CHUNK_BYTES))
    if want <= 1:
        return None
    # Align chunk boundaries to the tiled-layout granularity of axis 0 where
    # axis 0 is a (sub)lane axis; any boundary is correct, aligned is faster.
    if len(shape) == 1:
        align = 1024
    elif len(shape) == 2:
        align = 32
    else:
        align = 1
    rows = -(-dim0 // want)              # cdiv
    rows = -(-rows // align) * align     # round up to a multiple of `align`
    chunks = []
    start = 0
    while start < dim0:
        size = min(rows, dim0 - start)
        chunks.append((start, size))
        start += size
    if len(chunks) <= 1:
        return None
    return tuple(chunks)


def _make_copy_kernel(chunks):
    """Kernel copying x -> o entirely with HBM->HBM DMAs (no VMEM staging)."""
    n_sems = len(chunks) if chunks else 1

    def kernel(x_hbm, o_hbm, sems):
        if not chunks:
            cp = pltpu.make_async_copy(x_hbm, o_hbm, sems.at[0])
            cp.start()
            cp.wait()
            return
        # Start all chunk DMAs first so multiple DMA engines stream in
        # parallel, then wait on all of them. Chunk bounds are static Python
        # ints, so the .at[] views are zero-cost.
        for c, (start, size) in enumerate(chunks):
            pltpu.make_async_copy(
                x_hbm.at[pl.ds(start, size)],
                o_hbm.at[pl.ds(start, size)],
                sems.at[c],
            ).start()
        for c, (start, size) in enumerate(chunks):
            pltpu.make_async_copy(
                x_hbm.at[pl.ds(start, size)],
                o_hbm.at[pl.ds(start, size)],
                sems.at[c],
            ).wait()

    return kernel, n_sems


def no_change(x: jax.Array, *, copy: bool = True) -> jax.Array:
    """Pallas implementation of NoChange.forward (identity).

    copy=False returns x unchanged — zero HBM traffic, the optimal identity
    when the caller does not need a distinct buffer.
    copy=True (default) produces a fresh buffer via a single-pass HBM->HBM
    DMA copy (no VMEM staging, no grid stepping).
    """
    if not copy or x.size == 0:
        return x
    chunks = _plan_chunks(x.shape, x.dtype.itemsize)
    kernel, n_sems = _make_copy_kernel(chunks)
    nbytes = x.size * x.dtype.itemsize
    return pl.pallas_call(
        kernel,
        out_shape=jax.ShapeDtypeStruct(x.shape, x.dtype),
        in_specs=[pl.BlockSpec(memory_space=pl.ANY)],
        out_specs=pl.BlockSpec(memory_space=pl.ANY),
        scratch_shapes=[pltpu.SemaphoreType.DMA((n_sems,))],
        cost_estimate=pl.CostEstimate(
            flops=0, transcendentals=0, bytes_accessed=2 * nbytes
        ),
    )(x)


if __name__ == "__main__":
    key = jax.random.PRNGKey(0)
    x = jax.random.normal(key, (2, 4, 16, 16), dtype=jnp.float32)
    y = no_change(x)
    jax.block_until_ready(y)
    assert y.shape == x.shape and y.dtype == x.dtype
    assert bool(jnp.all(y == x))

    # Odd (non-128-aligned) shape + bf16: the DMA copy path has no alignment
    # requirement, so no pad/slice fallback is needed.
    x2 = jax.random.normal(jax.random.PRNGKey(1), (5, 7, 3), dtype=jnp.bfloat16)
    y2 = no_change(x2)
    jax.block_until_ready(y2)
    assert y2.shape == x2.shape and y2.dtype == x2.dtype
    assert bool(jnp.all(y2 == x2))

    # Zero-traffic path (semantically optimal identity).
    y3 = no_change(x, copy=False)
    assert y3 is x

    print("KERNEL_OK")
</pallas_src>

<mosaic_0001>
module attributes {stable_mosaic.version = 11 : i64} {
  func.func @kernel(%arg0: memref<2x4x16x16xf32, #tpu.memory_space<any>>, %arg1: memref<2x4x16x16xf32, #tpu.memory_space<any>>, %arg2: memref<1x!tpu.dma_semaphore, #tpu.memory_space<semaphore_mem>>) attributes {dimension_semantics = [], scalar_prefetch = 0 : i64, scratch_operands = 1 : i64, tpu.core_type = #tpu.core_type<tc>} {
    %c0_i32 = arith.constant 0 : i32
    %0 = tpu.memref_slice %arg2[%c0_i32] : memref<1x!tpu.dma_semaphore, #tpu.memory_space<semaphore_mem>> -> memref<1x!tpu.dma_semaphore, #tpu.memory_space<semaphore_mem>>
    %1 = tpu.memref_squeeze %0 : memref<1x!tpu.dma_semaphore, #tpu.memory_space<semaphore_mem>> -> memref<!tpu.dma_semaphore, #tpu.memory_space<semaphore_mem>>
    tpu.enqueue_dma source(%arg0 : memref<2x4x16x16xf32, #tpu.memory_space<any>>) target(%arg1 : memref<2x4x16x16xf32, #tpu.memory_space<any>>) target_semaphore(%1 : memref<!tpu.dma_semaphore, #tpu.memory_space<semaphore_mem>>)
    %c0_i32_0 = arith.constant 0 : i32
    %2 = tpu.memref_slice %arg2[%c0_i32_0] : memref<1x!tpu.dma_semaphore, #tpu.memory_space<semaphore_mem>> -> memref<1x!tpu.dma_semaphore, #tpu.memory_space<semaphore_mem>>
    %3 = tpu.memref_squeeze %2 : memref<1x!tpu.dma_semaphore, #tpu.memory_space<semaphore_mem>> -> memref<!tpu.dma_semaphore, #tpu.memory_space<semaphore_mem>>
    tpu.wait_dma2 semaphore(%3 : memref<!tpu.dma_semaphore, #tpu.memory_space<semaphore_mem>>) src(%arg0 : memref<2x4x16x16xf32, #tpu.memory_space<any>>) dst(%arg1 : memref<2x4x16x16xf32, #tpu.memory_space<any>>)
    return
  }
}

</mosaic_0001>

<llo_original>
// kernel: tpu_custom_call.1
$region0: #{tpu_custom_call.1}
  #allocation0 [shape = 'u32[]', space=smem, size = 0x4, offset = 0x4, fixed_abs, tag = 'smem constant byte address 0x4 - core index']
  #allocation1 [shape = 'u32[144,128]{1,0:T(1,128)}', space=vmem, size = 0x12000, scoped, tag = 'internal scratch']
  #allocation2 [shape = 's32[1]{0}', space=sflag, size = 0x4, scoped, tag = 'scratch operand']
  #allocation3 [shape = 's32[]', space=sflag, size = 0x4, offset = 0, fixed_abs, tag = 'sflag constant byte address 0x0 - dummy sync flag']
  #allocation4 [shape = 'u32[0]{0}', space=smem, size = 0, offset = 0, fixed_abs, tag = 'smem constant byte address 0x0 - null']
  %s0 = inlined_call_operand.hbm [shape: f32[2,4,16,16], index: 0, kind: input, shape index: {}]
  %s1 = inlined_call_operand.hbm [shape: f32[2,4,16,16], index: 1, kind: output, shape index: {}]
  %s2 = sld [smem:[#allocation0]]
  $region2: #{tpu_custom_call.1} parent=0
    _
  %s4 = ssub.s32 1, %s2
  %s5 = scalar_select 0, %s4, %s2
  %s7 = sshll.u32 1, 14
  %s8 = sxor.u32 4294967295, %s7
  %s11 = sshll.u32 3, 24
  %s12 = sxor.u32 4294967295, %s11
  %s13 = sand.u32 0, %s12
  %s15 = sor.u32 %s13, 0
  %18 = dma.general %s0, 2048, %s1, [#allocation2], [#allocation3], [#allocation4], %s15, 0
  %s19 = smul.u32 2, 4
  %s20 = smul.u32 %s19, 16
  %s21 = smul.u32 %s20, 1
  %s22 = sshll.u32 %s21, 4
  %23 = dma.done [#allocation2], %s22
  %24 = vsyncmov [#allocation2]
  %s25 = vpop.sfrf %24
  %p26 = scmp.eq.s32.totalorder %s25, 0
  %p27 = pneg %p26
  %29 = shalt.err (%p27)

</llo_original>
